<compile_context>
chip_gen: v5e
topology: v5e:2x2
jax: 0.10.0
libtpu: 0.0.40
codegen_flags: <defaults>
</compile_context>

<pallas_src>
import jax
import jax.numpy as jnp
import numpy as np
from jax.experimental import pallas as pl
from jax.experimental.pallas import tpu as pltpu


def _build_row_conv_weights(w_hwio, W, Cp):
    """Fold kx taps + W-border clipping of a 3x3 conv into banded matrices.

    w_hwio: (3, 3, C, C) HWIO weights.
    Returns (3, W*Cp, W*Cp) float32 where, for each ky,
      M[ky][xin*Cp + ci, x*Cp + co] = w[ky, xin - x + 1, ci, co]
    (zero when |xin - x| > 1), so   out_row = sum_ky in_row[y+ky-1] @ M[ky].
    """
    C = w_hwio.shape[2]
    w = jnp.zeros((3, 3, Cp, Cp), jnp.float32)
    w = w.at[:, :, :C, :C].set(w_hwio.astype(jnp.float32))

    xin = jnp.arange(W)[:, None]          # input column block  (matrix rows)
    xout = jnp.arange(W)[None, :]         # output column block (matrix cols)
    kx = xin - xout + 1                   # (W, W)
    valid = (kx >= 0) & (kx <= 2)
    kxc = jnp.clip(kx, 0, 2)

    blocks = w[:, kxc]                                        # (3, W, W, Cp, Cp)
    blocks = jnp.where(valid[None, :, :, None, None], blocks, 0.0)
    # (ky, xin, xout, ci, co) -> (ky, xin, ci, xout, co) -> (3, W*Cp, W*Cp)
    return blocks.transpose(0, 1, 3, 2, 4).reshape(3, W * Cp, W * Cp)


def residual_block_kernel(x_ref, w1_ref, b1_ref, w2_ref, b2_ref, o_ref, pad_ref):
    """One batch element per grid step.

    x_ref : (1, H+2, WC)  H-padded input, (W, Cp) fused into lanes (WC = W*Cp)
    w*_ref: (3, WC, WC)   banded row-conv matrices (one per ky)
    b*_ref: (1, WC)       channel bias tiled across W
    o_ref : (1, H, WC)    output
    pad_ref: VMEM (H+2, WC) scratch holding h1 with a 1-row zero halo
    """
    _, Hp, WC = x_ref.shape
    H = Hp - 2
    xp = x_ref[0]                                   # (H+2, WC)

    # ---- conv1 + bias + ReLU (bias folded into accumulator init) ----
    acc = jnp.broadcast_to(b1_ref[...], (H, WC)).astype(jnp.float32)
    for ky in range(3):
        acc = acc + jnp.dot(xp[ky:ky + H, :], w1_ref[ky],
                            preferred_element_type=jnp.float32)
    h1 = jnp.maximum(acc, 0.0)

    # ---- stage h1 with a 1-row zero halo for conv2 (only halo rows re-zeroed) ----
    pad_ref[0:1, :] = jnp.zeros((1, WC), jnp.float32)
    pad_ref[H + 1:H + 2, :] = jnp.zeros((1, WC), jnp.float32)
    pad_ref[1:H + 1, :] = h1

    # ---- conv2 + bias ----
    acc2 = jnp.broadcast_to(b2_ref[...], (H, WC)).astype(jnp.float32)
    for ky in range(3):
        acc2 = acc2 + jnp.dot(pad_ref[ky:ky + H, :], w2_ref[ky],
                              preferred_element_type=jnp.float32)

    # ---- residual add + final ReLU (residual reused in the same fused layout) ----
    out = jnp.maximum(acc2 + xp[1:H + 1, :], 0.0)
    o_ref[...] = out[None].astype(o_ref.dtype)


def residual_block(x_nhwc, w1, b1, w2, b2):
    """x_nhwc: (N, H, W, C) float32. Weights HWIO (3,3,C,C), biases (C,)."""
    N, H, W, C = x_nhwc.shape

    # Pad channels so the fused (W*Cp) lane axis is a multiple of 128 when possible.
    if (W * C) % 128 != 0 and 128 % W == 0:
        Cp = ((W * C + 127) // 128) * 128 // W
    else:
        Cp = C
    WC = W * Cp

    x = x_nhwc.astype(jnp.float32)
    # zero-pad H by 1 on each side and channels C -> Cp, then fuse (W, Cp) -> lanes
    x = jnp.pad(x, ((0, 0), (1, 1), (0, 0), (0, Cp - C))).reshape(N, H + 2, WC)

    w1m = _build_row_conv_weights(w1, W, Cp)            # (3, WC, WC)
    w2m = _build_row_conv_weights(w2, W, Cp)
    b1t = jnp.tile(jnp.pad(b1.astype(jnp.float32), (0, Cp - C)), W).reshape(1, WC)
    b2t = jnp.tile(jnp.pad(b2.astype(jnp.float32), (0, Cp - C)), W).reshape(1, WC)

    out = pl.pallas_call(
        residual_block_kernel,
        out_shape=jax.ShapeDtypeStruct((N, H, WC), jnp.float32),
        grid_spec=pltpu.PrefetchScalarGridSpec(
            num_scalar_prefetch=0,
            grid=(N,),
            in_specs=[
                pl.BlockSpec((1, H + 2, WC), lambda n: (n, 0, 0)),
                pl.BlockSpec((3, WC, WC), lambda n: (0, 0, 0)),
                pl.BlockSpec((1, WC), lambda n: (0, 0)),
                pl.BlockSpec((3, WC, WC), lambda n: (0, 0, 0)),
                pl.BlockSpec((1, WC), lambda n: (0, 0)),
            ],
            out_specs=pl.BlockSpec((1, H, WC), lambda n: (n, 0, 0)),
            scratch_shapes=[pltpu.VMEM((H + 2, WC), jnp.float32)],
        ),
        compiler_params=pltpu.CompilerParams(
            dimension_semantics=("parallel",),      # independent batch -> both TCs on v7x
            vmem_limit_bytes=32 * 1024 * 1024,
        ),
    )(x, w1m, b1t, w2m, b2t)

    # un-fuse lanes and drop channel padding
    return out.reshape(N, H, W, Cp)[..., :C].astype(x_nhwc.dtype)


if __name__ == "__main__":
    key = jax.random.PRNGKey(0)
    kx, kw1, kb1, kw2, kb2 = jax.random.split(key, 5)

    N, C, H, W = 2, 4, 16, 16
    x_nchw = jax.random.normal(kx, (N, C, H, W), jnp.float32)

    # Deterministic params; generated directly in HWIO = (3, 3, Cin, Cout)
    # with the same uniform init range as PyTorch's Conv2d.
    fan_in = C * 3 * 3
    bound = 1.0 / float(np.sqrt(fan_in))
    w1 = jax.random.uniform(kw1, (3, 3, C, C), jnp.float32, -bound, bound)
    b1 = jax.random.uniform(kb1, (C,), jnp.float32, -bound, bound)
    w2 = jax.random.uniform(kw2, (3, 3, C, C), jnp.float32, -bound, bound)
    b2 = jax.random.uniform(kb2, (C,), jnp.float32, -bound, bound)

    # NCHW -> NHWC for the TPU kernel
    x_nhwc = jnp.transpose(x_nchw, (0, 2, 3, 1))
    out_nhwc = residual_block(x_nhwc, w1, b1, w2, b2)
    out_nchw = jnp.transpose(out_nhwc, (0, 3, 1, 2))
    jax.block_until_ready(out_nchw)

    # Pure-JAX reference for correctness
    def conv(x, w, b):
        y = jax.lax.conv_general_dilated(
            x, w, window_strides=(1, 1), padding='SAME',
            dimension_numbers=('NHWC', 'HWIO', 'NHWC'))
        return y + b[None, None, None, :]

    ref = jnp.maximum(conv(x_nhwc, w1, b1), 0.0)
    ref = conv(ref, w2, b2) + x_nhwc
    ref = jnp.maximum(ref, 0.0)
    np.testing.assert_allclose(np.asarray(out_nhwc), np.asarray(ref),
                               rtol=1e-4, atol=1e-4)

    # TODO(synk): dropout (rate=0) and use_batchnorm=False branches are no-ops
    # for the default ResidualBlock config and are intentionally not emitted.
    print("KERNEL_OK")
</pallas_src>

<mosaic_0001>
module attributes {stable_mosaic.version = 11 : i64} {
  func.func @residual_block_kernel(%arg0: i32, %arg1: memref<1x18x128xf32, #tpu.memory_space<vmem>>, %arg2: memref<3x128x128xf32, #tpu.memory_space<vmem>>, %arg3: memref<1x128xf32, #tpu.memory_space<vmem>>, %arg4: memref<3x128x128xf32, #tpu.memory_space<vmem>>, %arg5: memref<1x128xf32, #tpu.memory_space<vmem>>, %arg6: memref<1x16x128xf32, #tpu.memory_space<vmem>>, %arg7: memref<18x128xf32, #tpu.memory_space<vmem>>) attributes {dimension_semantics = [#tpu.dimension_semantics<parallel>], iteration_bounds = array<i64: 2>, scalar_prefetch = 0 : i64, scratch_operands = 1 : i64, tpu.core_type = #tpu.core_type<tc>, window_params = [{transform_indices = @transform_0, window_bounds = array<i64: 1, 18, 128>}, {pipeline_mode = #tpu.pipeline_mode<synchronous>, transform_indices = @transform_1, window_bounds = array<i64: 3, 128, 128>}, {pipeline_mode = #tpu.pipeline_mode<synchronous>, transform_indices = @transform_2, window_bounds = array<i64: 1, 128>}, {pipeline_mode = #tpu.pipeline_mode<synchronous>, transform_indices = @transform_3, window_bounds = array<i64: 3, 128, 128>}, {pipeline_mode = #tpu.pipeline_mode<synchronous>, transform_indices = @transform_4, window_bounds = array<i64: 1, 128>}, {transform_indices = @transform_5, window_bounds = array<i64: 1, 16, 128>}]} {
    %c0 = arith.constant 0 : index
    %c0_0 = arith.constant 0 : index
    %c0_1 = arith.constant 0 : index
    %0 = vector.load %arg1[%c0, %c0_0, %c0_1] : memref<1x18x128xf32, #tpu.memory_space<vmem>>, vector<1x18x128xf32>
    %1 = vector.shape_cast %0 : vector<1x18x128xf32> to vector<18x128xf32>
    %c0_2 = arith.constant 0 : index
    %c0_3 = arith.constant 0 : index
    %2 = vector.load %arg3[%c0_2, %c0_3] : memref<1x128xf32, #tpu.memory_space<vmem>>, vector<1x128xf32>
    %3 = vector.shape_cast %2 : vector<1x128xf32> to vector<1x128xf32>
    %4 = vector.broadcast %3 : vector<1x128xf32> to vector<16x128xf32>
    %5 = vector.extract_strided_slice %1 {offsets = [0, 0], sizes = [16, 128], strides = [1, 1]} : vector<18x128xf32> to vector<16x128xf32>
    %c0_4 = arith.constant 0 : index
    %c0_5 = arith.constant 0 : index
    %c0_6 = arith.constant 0 : index
    %6 = vector.load %arg2[%c0_4, %c0_5, %c0_6] : memref<3x128x128xf32, #tpu.memory_space<vmem>>, vector<1x128x128xf32>
    %7 = vector.shape_cast %6 : vector<1x128x128xf32> to vector<128x128xf32>
    %cst = arith.constant dense<0.000000e+00> : vector<16x128xf32>
    %8 = tpu.matmul %5, %7, %cst {dimension_numbers = #tpu.dot_dimension_numbers<[1], [0], [0], [1], [0, 0, 1, 1], [], []>} : vector<16x128xf32>, vector<128x128xf32>, vector<16x128xf32> -> vector<16x128xf32>
    %9 = arith.addf %4, %8 : vector<16x128xf32>
    %10 = vector.extract_strided_slice %1 {offsets = [1, 0], sizes = [16, 128], strides = [1, 1]} : vector<18x128xf32> to vector<16x128xf32>
    %c1 = arith.constant 1 : index
    %c0_7 = arith.constant 0 : index
    %c0_8 = arith.constant 0 : index
    %11 = vector.load %arg2[%c1, %c0_7, %c0_8] : memref<3x128x128xf32, #tpu.memory_space<vmem>>, vector<1x128x128xf32>
    %12 = vector.shape_cast %11 : vector<1x128x128xf32> to vector<128x128xf32>
    %cst_9 = arith.constant dense<0.000000e+00> : vector<16x128xf32>
    %13 = tpu.matmul %10, %12, %cst_9 {dimension_numbers = #tpu.dot_dimension_numbers<[1], [0], [0], [1], [0, 0, 1, 1], [], []>} : vector<16x128xf32>, vector<128x128xf32>, vector<16x128xf32> -> vector<16x128xf32>
    %14 = arith.addf %9, %13 : vector<16x128xf32>
    %15 = vector.extract_strided_slice %1 {offsets = [2, 0], sizes = [16, 128], strides = [1, 1]} : vector<18x128xf32> to vector<16x128xf32>
    %c2 = arith.constant 2 : index
    %c0_10 = arith.constant 0 : index
    %c0_11 = arith.constant 0 : index
    %16 = vector.load %arg2[%c2, %c0_10, %c0_11] : memref<3x128x128xf32, #tpu.memory_space<vmem>>, vector<1x128x128xf32>
    %17 = vector.shape_cast %16 : vector<1x128x128xf32> to vector<128x128xf32>
    %cst_12 = arith.constant dense<0.000000e+00> : vector<16x128xf32>
    %18 = tpu.matmul %15, %17, %cst_12 {dimension_numbers = #tpu.dot_dimension_numbers<[1], [0], [0], [1], [0, 0, 1, 1], [], []>} : vector<16x128xf32>, vector<128x128xf32>, vector<16x128xf32> -> vector<16x128xf32>
    %19 = arith.addf %14, %18 : vector<16x128xf32>
    %cst_13 = arith.constant 0.000000e+00 : f32
    %20 = vector.broadcast %cst_13 : f32 to vector<16x128xf32>
    %21 = arith.maximumf %19, %20 : vector<16x128xf32>
    %cst_14 = arith.constant 0.000000e+00 : f32
    %22 = vector.broadcast %cst_14 : f32 to vector<1x128xf32>
    %c0_15 = arith.constant 0 : index
    %c0_16 = arith.constant 0 : index
    %23 = vector.load %arg7[%c0_15, %c0_16] : memref<18x128xf32, #tpu.memory_space<vmem>>, vector<1x128xf32>
    tpu.vector_store %arg7[%c0_15, %c0_16], %22 {strides = array<i32>} : memref<18x128xf32, #tpu.memory_space<vmem>>, vector<1x128xf32>,
    %cst_17 = arith.constant 0.000000e+00 : f32
    %24 = vector.broadcast %cst_17 : f32 to vector<1x128xf32>
    %c17 = arith.constant 17 : index
    %c0_18 = arith.constant 0 : index
    %25 = vector.load %arg7[%c17, %c0_18] : memref<18x128xf32, #tpu.memory_space<vmem>>, vector<1x128xf32>
    tpu.vector_store %arg7[%c17, %c0_18], %24 {strides = array<i32>} : memref<18x128xf32, #tpu.memory_space<vmem>>, vector<1x128xf32>,
    %c1_19 = arith.constant 1 : index
    %c0_20 = arith.constant 0 : index
    %26 = vector.load %arg7[%c1_19, %c0_20] : memref<18x128xf32, #tpu.memory_space<vmem>>, vector<16x128xf32>
    tpu.vector_store %arg7[%c1_19, %c0_20], %21 {strides = array<i32>} : memref<18x128xf32, #tpu.memory_space<vmem>>, vector<16x128xf32>,
    %c0_21 = arith.constant 0 : index
    %c0_22 = arith.constant 0 : index
    %27 = vector.load %arg5[%c0_21, %c0_22] : memref<1x128xf32, #tpu.memory_space<vmem>>, vector<1x128xf32>
    %28 = vector.shape_cast %27 : vector<1x128xf32> to vector<1x128xf32>
    %29 = vector.broadcast %28 : vector<1x128xf32> to vector<16x128xf32>
    %c0_23 = arith.constant 0 : index
    %c0_24 = arith.constant 0 : index
    %30 = vector.load %arg7[%c0_23, %c0_24] : memref<18x128xf32, #tpu.memory_space<vmem>>, vector<16x128xf32>
    %c0_25 = arith.constant 0 : index
    %c0_26 = arith.constant 0 : index
    %c0_27 = arith.constant 0 : index
    %31 = vector.load %arg4[%c0_25, %c0_26, %c0_27] : memref<3x128x128xf32, #tpu.memory_space<vmem>>, vector<1x128x128xf32>
    %32 = vector.shape_cast %31 : vector<1x128x128xf32> to vector<128x128xf32>
    %cst_28 = arith.constant dense<0.000000e+00> : vector<16x128xf32>
    %33 = tpu.matmul %30, %32, %cst_28 {dimension_numbers = #tpu.dot_dimension_numbers<[1], [0], [0], [1], [0, 0, 1, 1], [], []>} : vector<16x128xf32>, vector<128x128xf32>, vector<16x128xf32> -> vector<16x128xf32>
    %34 = arith.addf %29, %33 : vector<16x128xf32>
    %c1_29 = arith.constant 1 : index
    %c0_30 = arith.constant 0 : index
    %35 = vector.load %arg7[%c1_29, %c0_30] : memref<18x128xf32, #tpu.memory_space<vmem>>, vector<16x128xf32>
    %c1_31 = arith.constant 1 : index
    %c0_32 = arith.constant 0 : index
    %c0_33 = arith.constant 0 : index
    %36 = vector.load %arg4[%c1_31, %c0_32, %c0_33] : memref<3x128x128xf32, #tpu.memory_space<vmem>>, vector<1x128x128xf32>
    %37 = vector.shape_cast %36 : vector<1x128x128xf32> to vector<128x128xf32>
    %cst_34 = arith.constant dense<0.000000e+00> : vector<16x128xf32>
    %38 = tpu.matmul %35, %37, %cst_34 {dimension_numbers = #tpu.dot_dimension_numbers<[1], [0], [0], [1], [0, 0, 1, 1], [], []>} : vector<16x128xf32>, vector<128x128xf32>, vector<16x128xf32> -> vector<16x128xf32>
    %39 = arith.addf %34, %38 : vector<16x128xf32>
    %c2_35 = arith.constant 2 : index
    %c0_36 = arith.constant 0 : index
    %40 = vector.load %arg7[%c2_35, %c0_36] : memref<18x128xf32, #tpu.memory_space<vmem>>, vector<16x128xf32>
    %c2_37 = arith.constant 2 : index
    %c0_38 = arith.constant 0 : index
    %c0_39 = arith.constant 0 : index
    %41 = vector.load %arg4[%c2_37, %c0_38, %c0_39] : memref<3x128x128xf32, #tpu.memory_space<vmem>>, vector<1x128x128xf32>
    %42 = vector.shape_cast %41 : vector<1x128x128xf32> to vector<128x128xf32>
    %cst_40 = arith.constant dense<0.000000e+00> : vector<16x128xf32>
    %43 = tpu.matmul %40, %42, %cst_40 {dimension_numbers = #tpu.dot_dimension_numbers<[1], [0], [0], [1], [0, 0, 1, 1], [], []>} : vector<16x128xf32>, vector<128x128xf32>, vector<16x128xf32> -> vector<16x128xf32>
    %44 = arith.addf %39, %43 : vector<16x128xf32>
    %45 = vector.extract_strided_slice %1 {offsets = [1, 0], sizes = [16, 128], strides = [1, 1]} : vector<18x128xf32> to vector<16x128xf32>
    %46 = arith.addf %44, %45 : vector<16x128xf32>
    %cst_41 = arith.constant 0.000000e+00 : f32
    %47 = vector.broadcast %cst_41 : f32 to vector<16x128xf32>
    %48 = arith.maximumf %46, %47 : vector<16x128xf32>
    %49 = vector.shape_cast %48 : vector<16x128xf32> to vector<1x16x128xf32>
    %c0_42 = arith.constant 0 : index
    %c0_43 = arith.constant 0 : index
    %c0_44 = arith.constant 0 : index
    %50 = vector.load %arg6[%c0_42, %c0_43, %c0_44] : memref<1x16x128xf32, #tpu.memory_space<vmem>>, vector<1x16x128xf32>
    tpu.vector_store %arg6[%c0_42, %c0_43, %c0_44], %49 {strides = array<i32>} : memref<1x16x128xf32, #tpu.memory_space<vmem>>, vector<1x16x128xf32>,
    return
  }
  func.func @transform_0(%arg0: i32) -> (i32, i32, i32) {
    %c0_i32 = arith.constant 0 : i32
    %c0_i32_0 = arith.constant 0 : i32
    %c0_i32_1 = arith.constant 0 : i32
    return %arg0, %c0_i32, %c0_i32_0 : i32, i32, i32
  }
  func.func @transform_1(%arg0: i32) -> (i32, i32, i32) {
    %c0_i32 = arith.constant 0 : i32
    %c0_i32_0 = arith.constant 0 : i32
    %c0_i32_1 = arith.constant 0 : i32
    %c0_i32_2 = arith.constant 0 : i32
    return %c0_i32, %c0_i32_0, %c0_i32_1 : i32, i32, i32
  }
  func.func @transform_2(%arg0: i32) -> (i32, i32) {
    %c0_i32 = arith.constant 0 : i32
    %c0_i32_0 = arith.constant 0 : i32
    %c0_i32_1 = arith.constant 0 : i32
    return %c0_i32, %c0_i32_0 : i32, i32
  }
  func.func @transform_3(%arg0: i32) -> (i32, i32, i32) {
    %c0_i32 = arith.constant 0 : i32
    %c0_i32_0 = arith.constant 0 : i32
    %c0_i32_1 = arith.constant 0 : i32
    %c0_i32_2 = arith.constant 0 : i32
    return %c0_i32, %c0_i32_0, %c0_i32_1 : i32, i32, i32
  }
  func.func @transform_4(%arg0: i32) -> (i32, i32) {
    %c0_i32 = arith.constant 0 : i32
    %c0_i32_0 = arith.constant 0 : i32
    %c0_i32_1 = arith.constant 0 : i32
    return %c0_i32, %c0_i32_0 : i32, i32
  }
  func.func @transform_5(%arg0: i32) -> (i32, i32, i32) {
    %c0_i32 = arith.constant 0 : i32
    %c0_i32_0 = arith.constant 0 : i32
    %c0_i32_1 = arith.constant 0 : i32
    return %arg0, %c0_i32, %c0_i32_0 : i32, i32, i32
  }
}

</mosaic_0001>

<llo_original>
// kernel: tpu_custom_call.1
$region0: #{tpu_custom_call.1}
  #allocation0 [shape = 'u32[]', space=smem, size = 0x4, offset = 0x4, fixed_abs, tag = 'smem constant byte address 0x4 - core index']
  #allocation1 [shape = 'u32[72,128]{1,0:T(1,128)}', space=vmem, size = 0x9000, scoped, tag = 'internal scratch']
  #allocation2 [shape = 'f32[18,128]{1,0:T(8,128)}', space=vmem, size = 0x3000, scoped, tag = 'scratch operand']
  %s0 = inlined_call_operand.vmem [shape: f32[2,18,128], index: 0, kind: input, shape index: {}]
  %s1 = inlined_call_operand.hbm [shape: f32[3,128,128], index: 1, kind: input, shape index: {}]
  %s2 = inlined_call_operand.vmem [shape: f32[1,128], index: 2, kind: input, shape index: {}]
  %s3 = inlined_call_operand.hbm [shape: f32[3,128,128], index: 3, kind: input, shape index: {}]
  %s4 = inlined_call_operand.vmem [shape: f32[1,128], index: 4, kind: input, shape index: {}]
  %s5 = inlined_call_operand.hbm [shape: f32[2,16,128], index: 5, kind: output, shape index: {}]
  %s6 = sld [smem:[#allocation0]]
  $region61: #{tpu_custom_call.1} parent=0
    _
  %s8 = ssub.s32 1, %s6
  %s9 = scalar_select 0, %s8, %s6
  $region1: #{tpu_custom_call.1} parent=0
    #allocation3 [shape = 'u8[196608]{0}', space=vmem, size = 0x30000, scoped, tag = 'input window, operand 1, single buffered']
    #allocation4 [shape = 's32[2]{0}', space=sflag, size = 0x8, scoped, tag = 'scoped memory for tpu_custom_call.1']
    #allocation5 [shape = 's32[2]{0}', space=sflag, size = 0x8, scoped, tag = 'scoped memory for tpu_custom_call.1']
    #allocation6 [shape = 'u8[196608]{0}', space=vmem, size = 0x30000, scoped, tag = 'input window, operand 3, single buffered']
    #allocation7 [shape = 's32[1]{0}', space=sflag, size = 0x4, scoped, tag = 'scoped memory for tpu_custom_call.1']
    #allocation8 [shape = 'u8[16384]{0}', space=vmem, size = 0x4000, scoped, tag = 'output window, operand 0']
    %10 = vsyncpa [#allocation4], 0
    %11 = vsyncpa [#allocation7], 0
    %12 = vsyncpa [#allocation5], 0
    %s13 = scalar_lea.sflag [#allocation5], 1
    %14 = vsyncpa %s13, 0
    loop: start=0, step=1, limit=4
    $region2: #{tpu_custom_call.1} parent=1 // loop_pre_header
      _
    $region3: #{tpu_custom_call.1} parent=1 // loop_header
      %s16 = sphi 0, %s20
      %p17 = scmp.ge.s32.totalorder %s16, 4
      %s26 = sphi 0, %s28
      %s29 = sphi 0, %s26
      %s30 = sphi 0, %s29
      %s46 = sphi 0, %s30
      %s50 = sphi 0, %s50
      %s52 = sphi 0, %s50
      %s53 = sphi 0, %s52
      %s67 = sphi 0, %s53
      %s71 = sphi 0, %s71
      %s73 = sphi 0, %s71
      %s74 = sphi 0, %s73
      %s88 = sphi 0, %s74
      %s92 = sphi 0, %s92
      %s94 = sphi 0, %s92
      %s95 = sphi 0, %s94
      %s109 = sphi 0, %s95
      %s113 = sphi 0, %s113
      %s115 = sphi 0, %s113
      %s116 = sphi 0, %s115
      %s130 = sphi 0, %s116
      %s136 = sphi 0, %s138
      %s139 = sphi 0, %s136
      %s140 = sphi 0, %s139
      %s156 = sphi 0, %s140
    $region4: #{tpu_custom_call.1} parent=1 // loop_header_branch
      %19 = sbr.rel (%p17) target = $region8
    $region5: #{tpu_custom_call.1} parent=1 // loop_body
      %s21 = ssub.s32 %s16, 1
      %s22 = ssub.s32 %s16, 2
      %s23 = sadd.s32 %s16, 1
      %s24 = ssub.s32 %s16, %s23
      %p25 = scmp.eq.s32.totalorder %s24, 0
      %s27 = sadd.s32 %s26, 1
      %s28 = scalar_select %p25, %s26, %s27
      %p31 = pneg %p25
      %p32 = scmp.eq.s32.totalorder %s16, 1
      %p33 = por %p31, %p32
      %p34 = scmp.ne.s32.totalorder %s26, %s29
      %p35 = scmp.eq.s32.totalorder %s16, 0
      %p36 = por %p34, %p35
      %p37 = scmp.ne.s32.totalorder %s26, %s29
      %p38 = scmp.eq.s32.totalorder %s21, 1
      %p39 = por %p37, %p38
      %p40 = scmp.ne.s32.totalorder %s29, %s30
      %p41 = scmp.eq.s32.totalorder %s21, 0
      %p42 = por %p40, %p41
      %p43 = scmp.ne.s32.totalorder %s29, %s30
      %p44 = scmp.eq.s32.totalorder %s22, 1
      %p45 = por %p43, %p44
      %p47 = scmp.ne.s32.totalorder %s30, %s46
      %p48 = scmp.eq.s32.totalorder %s22, 0
      %p49 = por %p47, %p48
      %s51 = sadd.s32 %s50, 1
      %p54 = scmp.eq.s32.totalorder %s16, 1
      %p55 = scmp.ne.s32.totalorder %s50, %s52
      %p56 = scmp.eq.s32.totalorder %s16, 0
      %p57 = por %p55, %p56
      %p58 = scmp.ne.s32.totalorder %s50, %s52
      %p59 = scmp.eq.s32.totalorder %s21, 1
      %p60 = por %p58, %p59
      %p61 = scmp.ne.s32.totalorder %s52, %s53
      %p62 = scmp.eq.s32.totalorder %s21, 0
      %p63 = por %p61, %p62
      %p64 = scmp.ne.s32.totalorder %s52, %s53
      %p65 = scmp.eq.s32.totalorder %s22, 1
      %p66 = por %p64, %p65
      %p68 = scmp.ne.s32.totalorder %s53, %s67
      %p69 = scmp.eq.s32.totalorder %s22, 0
      %p70 = por %p68, %p69
      %s72 = sadd.s32 %s71, 1
      %p75 = scmp.eq.s32.totalorder %s16, 1
      %p76 = scmp.ne.s32.totalorder %s71, %s73
      %p77 = scmp.eq.s32.totalorder %s16, 0
      %p78 = por %p76, %p77
      %p79 = scmp.ne.s32.totalorder %s71, %s73
      %p80 = scmp.eq.s32.totalorder %s21, 1
      %p81 = por %p79, %p80
      %p82 = scmp.ne.s32.totalorder %s73, %s74
      %p83 = scmp.eq.s32.totalorder %s21, 0
      %p84 = por %p82, %p83
      %p85 = scmp.ne.s32.totalorder %s73, %s74
      %p86 = scmp.eq.s32.totalorder %s22, 1
      %p87 = por %p85, %p86
      %p89 = scmp.ne.s32.totalorder %s74, %s88
      %p90 = scmp.eq.s32.totalorder %s22, 0
      %p91 = por %p89, %p90
      %s93 = sadd.s32 %s92, 1
      %p96 = scmp.eq.s32.totalorder %s16, 1
      %p97 = scmp.ne.s32.totalorder %s92, %s94
      %p98 = scmp.eq.s32.totalorder %s16, 0
      %p99 = por %p97, %p98
      %p100 = scmp.ne.s32.totalorder %s92, %s94
      %p101 = scmp.eq.s32.totalorder %s21, 1
      %p102 = por %p100, %p101
      %p103 = scmp.ne.s32.totalorder %s94, %s95
      %p104 = scmp.eq.s32.totalorder %s21, 0
      %p105 = por %p103, %p104
      %p106 = scmp.ne.s32.totalorder %s94, %s95
      %p107 = scmp.eq.s32.totalorder %s22, 1
      %p108 = por %p106, %p107
      %p110 = scmp.ne.s32.totalorder %s95, %s109
      %p111 = scmp.eq.s32.totalorder %s22, 0
      %p112 = por %p110, %p111
      %s114 = sadd.s32 %s113, 1
      %p117 = scmp.eq.s32.totalorder %s16, 1
      %p118 = scmp.ne.s32.totalorder %s113, %s115
      %p119 = scmp.eq.s32.totalorder %s16, 0
      %p120 = por %p118, %p119
      %p121 = scmp.ne.s32.totalorder %s113, %s115
      %p122 = scmp.eq.s32.totalorder %s21, 1
      %p123 = por %p121, %p122
      %p124 = scmp.ne.s32.totalorder %s115, %s116
      %p125 = scmp.eq.s32.totalorder %s21, 0
      %p126 = por %p124, %p125
      %p127 = scmp.ne.s32.totalorder %s115, %s116
      %p128 = scmp.eq.s32.totalorder %s22, 1
      %p129 = por %p127, %p128
      %p131 = scmp.ne.s32.totalorder %s116, %s130
      %p132 = scmp.eq.s32.totalorder %s22, 0
      %p133 = por %p131, %p132
      %s134 = ssub.s32 %s16, %s23
      %p135 = scmp.eq.s32.totalorder %s134, 0
      %s137 = sadd.s32 %s136, 1
      %s138 = scalar_select %p135, %s136, %s137
      %p141 = pneg %p135
      %p142 = scmp.eq.s32.totalorder %s16, 1
      %p143 = por %p141, %p142
      %p144 = scmp.ne.s32.totalorder %s136, %s139
      %p145 = scmp.eq.s32.totalorder %s16, 0
      %p146 = por %p144, %p145
      %p147 = scmp.ne.s32.totalorder %s136, %s139
      %p148 = scmp.eq.s32.totalorder %s21, 1
      %p149 = por %p147, %p148
      %p150 = scmp.ne.s32.totalorder %s139, %s140
      %p151 = scmp.eq.s32.totalorder %s21, 0
      %p152 = por %p150, %p151
      %p153 = scmp.ne.s32.totalorder %s139, %s140
      %p154 = scmp.eq.s32.totalorder %s22, 1
      %p155 = por %p153, %p154
      %p157 = scmp.ne.s32.totalorder %s140, %s156
      %p158 = scmp.eq.s32.totalorder %s22, 0
      %p159 = por %p157, %p158
      %p160 = scmp.le.s32.totalorder 1, %s16
      %p161 = scmp.lt.s32.totalorder %s16, 3
      %p162 = pnand %p160, %p161
      %p163 = pneg %p162
      // Predicated region
      $region9: #{tpu_custom_call.1} parent=5 // pred_check
        _
      $region10: #{tpu_custom_call.1} parent=5 // pred_check_branch
        %165 = sbr.rel (%p162) target = $region12
      $region11: #{tpu_custom_call.1} parent=5 // pred_region
        %s166 = ssub.s32 %s16, 1
        // Predicated region
        $region13: #{tpu_custom_call.1} parent=11 // pred_check
          %p167 = pneg %p63
        $region14: #{tpu_custom_call.1} parent=11 // pred_check_branch
          %169 = sbr.rel (%p167) target = $region16
        $region15: #{tpu_custom_call.1} parent=11 // pred_region
          %171 = vsyncadd [#allocation4], 0
          %s172 = sshll.u32 %s1, 4
          %s173 = int_to_ptr.hbm [resolvable:$true] %s172
          %s174 = sshll.u32 [#allocation3], 4
          %s175 = int_to_ptr.vmem [resolvable:$true] %s174
          %180 = dma.hbm_to_vmem [thread:$0]  %s173, 6144, %s175, [#allocation4], 128, 128, 8
        $region16: #{tpu_custom_call.1} parent=11 // pred_fallthru
          _
        // Predicated region
        $region17: #{tpu_custom_call.1} parent=11 // pred_check
          %p181 = pneg %p84
        $region18: #{tpu_custom_call.1} parent=11 // pred_check_branch
          %183 = sbr.rel (%p181) target = $region20
        $region19: #{tpu_custom_call.1} parent=11 // pred_region
          _
        $region20: #{tpu_custom_call.1} parent=11 // pred_fallthru
          _
        // Predicated region
        $region21: #{tpu_custom_call.1} parent=11 // pred_check
          %p184 = pneg %p105
        $region22: #{tpu_custom_call.1} parent=11 // pred_check_branch
          %186 = sbr.rel (%p184) target = $region24
        $region23: #{tpu_custom_call.1} parent=11 // pred_region
          %188 = vsyncadd [#allocation7], 0
          %s189 = sshll.u32 %s3, 4
          %s190 = int_to_ptr.hbm [resolvable:$true] %s189
          %s191 = sshll.u32 [#allocation6], 4
          %s192 = int_to_ptr.vmem [resolvable:$true] %s191
          %197 = dma.hbm_to_vmem [thread:$0]  %s190, 6144, %s192, [#allocation7], 128, 128, 8
        $region24: #{tpu_custom_call.1} parent=11 // pred_fallthru
          _
        // Predicated region
        $region25: #{tpu_custom_call.1} parent=11 // pred_check
          %p198 = pneg %p126
        $region26: #{tpu_custom_call.1} parent=11 // pred_check_branch
          %200 = sbr.rel (%p198) target = $region28
        $region27: #{tpu_custom_call.1} parent=11 // pred_region
          _
        $region28: #{tpu_custom_call.1} parent=11 // pred_fallthru
          _
      $region12: #{tpu_custom_call.1} parent=5 // pred_fallthru
        _
      %p201 = scmp.lt.s32.totalorder %s16, 2
      // Predicated region
      $region29: #{tpu_custom_call.1} parent=5 // pred_check
        %p202 = pneg %p201
      $region30: #{tpu_custom_call.1} parent=5 // pred_check_branch
        %204 = sbr.rel (%p202) target = $region32
      $region31: #{tpu_custom_call.1} parent=5 // pred_region
        // Predicated region
        $region33: #{tpu_custom_call.1} parent=31 // pred_check
          %p205 = pneg %p36
        $region34: #{tpu_custom_call.1} parent=31 // pred_check_branch
          %207 = sbr.rel (%p205) target = $region36
        $region35: #{tpu_custom_call.1} parent=31 // pred_region
          %p208 = scmp.lt.s32.totalorder %s16, 1
          %s209 = scalar_select %p208, %s16, 1
          %s210 = smul.addr %s209, 3
          %s211 = smul.addr %s210, 8
          %s212 = scalar_lea.vmem %s0, %s211
        $region36: #{tpu_custom_call.1} parent=31 // pred_fallthru
          _
      $region32: #{tpu_custom_call.1} parent=5 // pred_fallthru
        _
      %p213 = scmp.le.s32.totalorder 1, %s16
      %p214 = scmp.lt.s32.totalorder %s16, 3
      %p215 = pnand %p213, %p214
      %p216 = pneg %p215
      // Predicated region
      $region37: #{tpu_custom_call.1} parent=5 // pred_check
        _
      $region38: #{tpu_custom_call.1} parent=5 // pred_check_branch
        %218 = sbr.rel (%p215) target = $region40
      $region39: #{tpu_custom_call.1} parent=5 // pred_region
        %s219 = ssub.s32 %s16, 1
        // Predicated region
        $region41: #{tpu_custom_call.1} parent=39 // pred_check
          %p220 = pneg %p63
        $region42: #{tpu_custom_call.1} parent=39 // pred_check_branch
          %222 = sbr.rel (%p220) target = $region44
        $region43: #{tpu_custom_call.1} parent=39 // pred_region
          %224 = dma.done [#allocation4], 6144
        $region44: #{tpu_custom_call.1} parent=39 // pred_fallthru
          _
        // Predicated region
        $region45: #{tpu_custom_call.1} parent=39 // pred_check
          %p225 = pneg %p105
        $region46: #{tpu_custom_call.1} parent=39 // pred_check_branch
          %227 = sbr.rel (%p225) target = $region48
        $region47: #{tpu_custom_call.1} parent=39 // pred_region
          %229 = dma.done [#allocation7], 6144
        $region48: #{tpu_custom_call.1} parent=39 // pred_fallthru
          _
        %p230 = scmp.lt.s32.totalorder %s21, 1
        %s231 = scalar_select %p230, %s21, 1
        %s232 = smul.addr %s231, 3
        %s233 = smul.addr %s232, 8
        %s234 = scalar_lea.vmem %s0, %s233
        %p235 = pneg %p42
        %p236 = pneg %p39
        %p237 = pneg %p63
        %p238 = pneg %p60
        %p239 = pneg %p84
        %p240 = pneg %p81
        %p241 = pneg %p105
        %p242 = pneg %p102
        %p243 = pneg %p126
        %p244 = pneg %p123
        %p245 = pneg %p152
        %p246 = pneg %p149
        %s247 = sand.u32 %s139, 1
        %s248 = scalar_lea.sflag [#allocation5], %s247
        %s249 = sand.u32 %s139, 1
        %s250 = smul.addr %s249, 16
        %s251 = scalar_lea.vmem [#allocation8], %s250
        %p252 = scmp.lt.s32.totalorder %s21, 1
        %s253 = scalar_select %p252, %s21, 1
        %s254 = smul.addr %s253, 3
        %s255 = smul.addr %s254, 8
        %s256 = scalar_lea.vmem %s0, %s255
        %v257 = vld [vmem:[%s256] sm:$0xff]
        %v258 = vld [vmem:[%s256 + $0x8] sm:$0xff]
        %v259 = vld [vmem:[%s256 + $0x10] sm:$0x3]
        %v260 = vld [vmem:[%s2] sm:$0x1]
        %v262 = vperm.slane %v260, 0
        %v264 = vld [vmem:[#allocation3] sm:$0xff]
        %v265 = vld [vmem:[#allocation3 + $0x8] sm:$0xff]
        %v266 = vld [vmem:[#allocation3 + $0x10] sm:$0xff]
        %v267 = vld [vmem:[#allocation3 + $0x18] sm:$0xff]
        %v268 = vld [vmem:[#allocation3 + $0x20] sm:$0xff]
        %v269 = vld [vmem:[#allocation3 + $0x28] sm:$0xff]
        %v270 = vld [vmem:[#allocation3 + $0x30] sm:$0xff]
        %v271 = vld [vmem:[#allocation3 + $0x38] sm:$0xff]
        %v272 = vld [vmem:[#allocation3 + $0x40] sm:$0xff]
        %v273 = vld [vmem:[#allocation3 + $0x48] sm:$0xff]
        %v274 = vld [vmem:[#allocation3 + $0x50] sm:$0xff]
        %v275 = vld [vmem:[#allocation3 + $0x58] sm:$0xff]
        %v276 = vld [vmem:[#allocation3 + $0x60] sm:$0xff]
        %v277 = vld [vmem:[#allocation3 + $0x68] sm:$0xff]
        %v278 = vld [vmem:[#allocation3 + $0x70] sm:$0xff]
        %v279 = vld [vmem:[#allocation3 + $0x78] sm:$0xff]
        %280 = vmatpush.msra.mxu0 %v279
        %281 = vmatpush.msra.mxu0 %v278
        %282 = vmatpush.msra.mxu0 %v277
        %283 = vmatpush.msra.mxu0 %v276
        %284 = vmatpush.msra.mxu0 %v275
        %285 = vmatpush.msra.mxu0 %v274
        %286 = vmatpush.msra.mxu0 %v273
        %287 = vmatpush.msra.mxu0 %v272
        %288 = vmatpush.msra.mxu0 %v271
        %289 = vmatpush.msra.mxu0 %v270
        %290 = vmatpush.msra.mxu0 %v269
        %291 = vmatpush.msra.mxu0 %v268
        %292 = vmatpush.msra.mxu0 %v267
        %293 = vmatpush.msra.mxu0 %v266
        %294 = vmatpush.msra.mxu0 %v265
        %295 = vmatpush.msra.mxu0 %v264
        %296 = vmatmul.f32.gmra.mxu0 %v257
        %v297 = vpop.f32.mrf.mxu0
        %v298 = vadd.f32 0.0, %v297
        %299 = vmatmul.f32.gmra.mxu0 %v258
        %v300 = vpop.f32.mrf.mxu0
        %v301 = vadd.f32 0.0, %v300
        %302 = vdwg.mxu0
        %v303 = vadd.f32 %v262, %v298
        %v304 = vadd.f32 %v262, %v301
        %s305 = scalar_lea.vmem [#allocation3], 128
        %v306 = vld [vmem:[%s305] sm:$0xff]
        %v307 = vld [vmem:[%s305 + $0x8] sm:$0xff]
        %v308 = vld [vmem:[%s305 + $0x10] sm:$0xff]
        %v309 = vld [vmem:[%s305 + $0x18] sm:$0xff]
        %v310 = vld [vmem:[%s305 + $0x20] sm:$0xff]
        %v311 = vld [vmem:[%s305 + $0x28] sm:$0xff]
        %v312 = vld [vmem:[%s305 + $0x30] sm:$0xff]
        %v313 = vld [vmem:[%s305 + $0x38] sm:$0xff]
        %v314 = vld [vmem:[%s305 + $0x40] sm:$0xff]
        %v315 = vld [vmem:[%s305 + $0x48] sm:$0xff]
        %v316 = vld [vmem:[%s305 + $0x50] sm:$0xff]
        %v317 = vld [vmem:[%s305 + $0x58] sm:$0xff]
        %v318 = vld [vmem:[%s305 + $0x60] sm:$0xff]
        %v319 = vld [vmem:[%s305 + $0x68] sm:$0xff]
        %v320 = vld [vmem:[%s305 + $0x70] sm:$0xff]
        %v321 = vld [vmem:[%s305 + $0x78] sm:$0xff]
        %vm325 = vcmask 1046528
        %v326 = vrot.slane %v257, 1
        %v327 = vrot.slane %v258, 1
        %v328 = vsel %vm325, %v326, %v327
        %v329 = vrot.slane %v259, 1
        %v330 = vsel %vm325, %v327, %v329
        %333 = vmatpush.msra.mxu0 %v321
        %334 = vmatpush.msra.mxu0 %v320
        %335 = vmatpush.msra.mxu0 %v319
        %336 = vmatpush.msra.mxu0 %v318
        %337 = vmatpush.msra.mxu0 %v317
        %338 = vmatpush.msra.mxu0 %v316
        %339 = vmatpush.msra.mxu0 %v315
        %340 = vmatpush.msra.mxu0 %v314
        %341 = vmatpush.msra.mxu0 %v313
        %342 = vmatpush.msra.mxu0 %v312
        %343 = vmatpush.msra.mxu0 %v311
        %344 = vmatpush.msra.mxu0 %v310
        %345 = vmatpush.msra.mxu0 %v309
        %346 = vmatpush.msra.mxu0 %v308
        %347 = vmatpush.msra.mxu0 %v307
        %348 = vmatpush.msra.mxu0 %v306
        %349 = vmatmul.f32.gmra.mxu0 %v328
        %v350 = vpop.f32.mrf.mxu0
        %v351 = vadd.f32 0.0, %v350
        %352 = vmatmul.f32.gmra.mxu0 %v330
        %v353 = vpop.f32.mrf.mxu0
        %v354 = vadd.f32 0.0, %v353
        %355 = vdwg.mxu0
        %v356 = vadd.f32 %v303, %v351
        %v357 = vadd.f32 %v304, %v354
        %s358 = scalar_lea.vmem [#allocation3], 256
        %v359 = vld [vmem:[%s358] sm:$0xff]
        %v360 = vld [vmem:[%s358 + $0x8] sm:$0xff]
        %v361 = vld [vmem:[%s358 + $0x10] sm:$0xff]
        %v362 = vld [vmem:[%s358 + $0x18] sm:$0xff]
        %v363 = vld [vmem:[%s358 + $0x20] sm:$0xff]
        %v364 = vld [vmem:[%s358 + $0x28] sm:$0xff]
        %v365 = vld [vmem:[%s358 + $0x30] sm:$0xff]
        %v366 = vld [vmem:[%s358 + $0x38] sm:$0xff]
        %v367 = vld [vmem:[%s358 + $0x40] sm:$0xff]
        %v368 = vld [vmem:[%s358 + $0x48] sm:$0xff]
        %v369 = vld [vmem:[%s358 + $0x50] sm:$0xff]
        %v370 = vld [vmem:[%s358 + $0x58] sm:$0xff]
        %v371 = vld [vmem:[%s358 + $0x60] sm:$0xff]
        %v372 = vld [vmem:[%s358 + $0x68] sm:$0xff]
        %v373 = vld [vmem:[%s358 + $0x70] sm:$0xff]
        %v374 = vld [vmem:[%s358 + $0x78] sm:$0xff]
        %vm375 = vcmask 1045504
        %v376 = vrot.slane %v257, 2
        %v377 = vrot.slane %v258, 2
        %v378 = vsel %vm375, %v376, %v377
        %v379 = vrot.slane %v259, 2
        %v380 = vsel %vm375, %v377, %v379
        %383 = vmatpush.msra.mxu0 %v374
        %384 = vmatpush.msra.mxu0 %v373
        %385 = vmatpush.msra.mxu0 %v372
        %386 = vmatpush.msra.mxu0 %v371
        %387 = vmatpush.msra.mxu0 %v370
        %388 = vmatpush.msra.mxu0 %v369
        %389 = vmatpush.msra.mxu0 %v368
        %390 = vmatpush.msra.mxu0 %v367
        %391 = vmatpush.msra.mxu0 %v366
        %392 = vmatpush.msra.mxu0 %v365
        %393 = vmatpush.msra.mxu0 %v364
        %394 = vmatpush.msra.mxu0 %v363
        %395 = vmatpush.msra.mxu0 %v362
        %396 = vmatpush.msra.mxu0 %v361
        %397 = vmatpush.msra.mxu0 %v360
        %398 = vmatpush.msra.mxu0 %v359
        %399 = vmatmul.f32.gmra.mxu0 %v378
        %v400 = vpop.f32.mrf.mxu0
        %v401 = vadd.f32 0.0, %v400
        %402 = vmatmul.f32.gmra.mxu0 %v380
        %v403 = vpop.f32.mrf.mxu0
        %v404 = vadd.f32 0.0, %v403
        %405 = vdwg.mxu0
        %v406 = vadd.f32 %v356, %v401
        %v407 = vadd.f32 %v357, %v404
        %v408 = vmax.f32 %v406, 0.0
        %v409 = vmax.f32 %v407, 0.0
        %410 = vst [vmem:[#allocation2] sm:$0x1] 0.0
        %411 = vst [vmem:[#allocation2 + $0x11] sm:$0x1] 0.0
        %412 = vst [vmem:[#allocation2 + $0x1] sm:$0xff] %v408
        %413 = vst [vmem:[#allocation2 + $0x9] sm:$0xff] %v409
        %v414 = vld [vmem:[%s4] sm:$0x1]
        %v416 = vperm.slane %v414, 0
        %v418 = vld [vmem:[#allocation2] sm:$0xff]
        %v419 = vld [vmem:[#allocation2 + $0x8] sm:$0xff]
        %v420 = vld [vmem:[#allocation6] sm:$0xff]
        %v421 = vld [vmem:[#allocation6 + $0x8] sm:$0xff]
        %v422 = vld [vmem:[#allocation6 + $0x10] sm:$0xff]
        %v423 = vld [vmem:[#allocation6 + $0x18] sm:$0xff]
        %v424 = vld [vmem:[#allocation6 + $0x20] sm:$0xff]
        %v425 = vld [vmem:[#allocation6 + $0x28] sm:$0xff]
        %v426 = vld [vmem:[#allocation6 + $0x30] sm:$0xff]
        %v427 = vld [vmem:[#allocation6 + $0x38] sm:$0xff]
        %v428 = vld [vmem:[#allocation6 + $0x40] sm:$0xff]
        %v429 = vld [vmem:[#allocation6 + $0x48] sm:$0xff]
        %v430 = vld [vmem:[#allocation6 + $0x50] sm:$0xff]
        %v431 = vld [vmem:[#allocation6 + $0x58] sm:$0xff]
        %v432 = vld [vmem:[#allocation6 + $0x60] sm:$0xff]
        %v433 = vld [vmem:[#allocation6 + $0x68] sm:$0xff]
        %v434 = vld [vmem:[#allocation6 + $0x70] sm:$0xff]
        %v435 = vld [vmem:[#allocation6 + $0x78] sm:$0xff]
        %436 = vmatpush.msra.mxu0 %v435
        %437 = vmatpush.msra.mxu0 %v434
        %438 = vmatpush.msra.mxu0 %v433
        %439 = vmatpush.msra.mxu0 %v432
        %440 = vmatpush.msra.mxu0 %v431
        %441 = vmatpush.msra.mxu0 %v430
        %442 = vmatpush.msra.mxu0 %v429
        %443 = vmatpush.msra.mxu0 %v428
        %444 = vmatpush.msra.mxu0 %v427
        %445 = vmatpush.msra.mxu0 %v426
        %446 = vmatpush.msra.mxu0 %v425
        %447 = vmatpush.msra.mxu0 %v424
        %448 = vmatpush.msra.mxu0 %v423
        %449 = vmatpush.msra.mxu0 %v422
        %450 = vmatpush.msra.mxu0 %v421
        %451 = vmatpush.msra.mxu0 %v420
        %452 = vmatmul.f32.gmra.mxu0 %v418
        %v453 = vpop.f32.mrf.mxu0
        %v454 = vadd.f32 0.0, %v453
        %455 = vmatmul.f32.gmra.mxu0 %v419
        %v456 = vpop.f32.mrf.mxu0
        %v457 = vadd.f32 0.0, %v456
        %458 = vdwg.mxu0
        %v459 = vadd.f32 %v416, %v454
        %v460 = vadd.f32 %v416, %v457
        %v461 = vld [vmem:[#allocation2 + $0x1] sm:$0xff]
        %v462 = vld [vmem:[#allocation2 + $0x9] sm:$0xff]
        %s463 = scalar_lea.vmem [#allocation6], 128
        %v464 = vld [vmem:[%s463] sm:$0xff]
        %v465 = vld [vmem:[%s463 + $0x8] sm:$0xff]
        %v466 = vld [vmem:[%s463 + $0x10] sm:$0xff]
        %v467 = vld [vmem:[%s463 + $0x18] sm:$0xff]
        %v468 = vld [vmem:[%s463 + $0x20] sm:$0xff]
        %v469 = vld [vmem:[%s463 + $0x28] sm:$0xff]
        %v470 = vld [vmem:[%s463 + $0x30] sm:$0xff]
        %v471 = vld [vmem:[%s463 + $0x38] sm:$0xff]
        %v472 = vld [vmem:[%s463 + $0x40] sm:$0xff]
        %v473 = vld [vmem:[%s463 + $0x48] sm:$0xff]
        %v474 = vld [vmem:[%s463 + $0x50] sm:$0xff]
        %v475 = vld [vmem:[%s463 + $0x58] sm:$0xff]
        %v476 = vld [vmem:[%s463 + $0x60] sm:$0xff]
        %v477 = vld [vmem:[%s463 + $0x68] sm:$0xff]
        %v478 = vld [vmem:[%s463 + $0x70] sm:$0xff]
        %v479 = vld [vmem:[%s463 + $0x78] sm:$0xff]
        %480 = vmatpush.msra.mxu0 %v479
        %481 = vmatpush.msra.mxu0 %v478
        %482 = vmatpush.msra.mxu0 %v477
        %483 = vmatpush.msra.mxu0 %v476
        %484 = vmatpush.msra.mxu0 %v475
        %485 = vmatpush.msra.mxu0 %v474
        %486 = vmatpush.msra.mxu0 %v473
        %487 = vmatpush.msra.mxu0 %v472
        %488 = vmatpush.msra.mxu0 %v471
        %489 = vmatpush.msra.mxu0 %v470
        %490 = vmatpush.msra.mxu0 %v469
        %491 = vmatpush.msra.mxu0 %v468
        %492 = vmatpush.msra.mxu0 %v467
        %493 = vmatpush.msra.mxu0 %v466
        %494 = vmatpush.msra.mxu0 %v465
        %495 = vmatpush.msra.mxu0 %v464
        %496 = vmatmul.f32.gmra.mxu0 %v461
        %v497 = vpop.f32.mrf.mxu0
        %v498 = vadd.f32 0.0, %v497
        %499 = vmatmul.f32.gmra.mxu0 %v462
        %v500 = vpop.f32.mrf.mxu0
        %v501 = vadd.f32 0.0, %v500
        %502 = vdwg.mxu0
        %v503 = vadd.f32 %v459, %v498
        %v504 = vadd.f32 %v460, %v501
        %v505 = vld [vmem:[#allocation2 + $0x2] sm:$0xff]
        %v506 = vld [vmem:[#allocation2 + $0xa] sm:$0xff]
        %s507 = scalar_lea.vmem [#allocation6], 256
        %v508 = vld [vmem:[%s507] sm:$0xff]
        %v509 = vld [vmem:[%s507 + $0x8] sm:$0xff]
        %v510 = vld [vmem:[%s507 + $0x10] sm:$0xff]
        %v511 = vld [vmem:[%s507 + $0x18] sm:$0xff]
        %v512 = vld [vmem:[%s507 + $0x20] sm:$0xff]
        %v513 = vld [vmem:[%s507 + $0x28] sm:$0xff]
        %v514 = vld [vmem:[%s507 + $0x30] sm:$0xff]
        %v515 = vld [vmem:[%s507 + $0x38] sm:$0xff]
        %v516 = vld [vmem:[%s507 + $0x40] sm:$0xff]
        %v517 = vld [vmem:[%s507 + $0x48] sm:$0xff]
        %v518 = vld [vmem:[%s507 + $0x50] sm:$0xff]
        %v519 = vld [vmem:[%s507 + $0x58] sm:$0xff]
        %v520 = vld [vmem:[%s507 + $0x60] sm:$0xff]
        %v521 = vld [vmem:[%s507 + $0x68] sm:$0xff]
        %v522 = vld [vmem:[%s507 + $0x70] sm:$0xff]
        %v523 = vld [vmem:[%s507 + $0x78] sm:$0xff]
        %524 = vmatpush.msra.mxu0 %v523
        %525 = vmatpush.msra.mxu0 %v522
        %526 = vmatpush.msra.mxu0 %v521
        %527 = vmatpush.msra.mxu0 %v520
        %528 = vmatpush.msra.mxu0 %v519
        %529 = vmatpush.msra.mxu0 %v518
        %530 = vmatpush.msra.mxu0 %v517
        %531 = vmatpush.msra.mxu0 %v516
        %532 = vmatpush.msra.mxu0 %v515
        %533 = vmatpush.msra.mxu0 %v514
        %534 = vmatpush.msra.mxu0 %v513
        %535 = vmatpush.msra.mxu0 %v512
        %536 = vmatpush.msra.mxu0 %v511
        %537 = vmatpush.msra.mxu0 %v510
        %538 = vmatpush.msra.mxu0 %v509
        %539 = vmatpush.msra.mxu0 %v508
        %540 = vmatmul.f32.gmra.mxu0 %v505
        %v541 = vpop.f32.mrf.mxu0
        %v542 = vadd.f32 0.0, %v541
        %543 = vmatmul.f32.gmra.mxu0 %v506
        %v544 = vpop.f32.mrf.mxu0
        %v545 = vadd.f32 0.0, %v544
        %546 = vdwg.mxu0
        %v547 = vadd.f32 %v503, %v542
        %v548 = vadd.f32 %v504, %v545
        %v549 = vadd.f32 %v547, %v328
        %v550 = vadd.f32 %v548, %v330
        %v551 = vmax.f32 %v549, 0.0
        %v552 = vmax.f32 %v550, 0.0
        %553 = vst [vmem:[%s251] sm:$0xff] %v551
        %554 = vst [vmem:[%s251 + $0x8] sm:$0xff] %v552
        %s555 = sand.u32 %s139, 1
        %s556 = scalar_lea.sflag [#allocation5], %s555
        %s557 = sand.u32 %s139, 1
        %s558 = smul.addr %s557, 16
        %s559 = scalar_lea.vmem [#allocation8], %s558
        // Predicated region
        $region49: #{tpu_custom_call.1} parent=39 // pred_check
          %p560 = pneg %p149
        $region50: #{tpu_custom_call.1} parent=39 // pred_check_branch
          %562 = sbr.rel (%p560) target = $region52
        $region51: #{tpu_custom_call.1} parent=39 // pred_region
          %564 = vsyncadd %s556, 0
          %s565 = smul.addr %s21, 2
          %s566 = smul.addr %s565, 8
          %s567 = scalar_lea.hbm %s5, %s566
          %s568 = sshll.u32 %s559, 4
          %s569 = int_to_ptr.vmem [resolvable:$true] %s568
          %s570 = sshll.u32 %s567, 4
          %s571 = int_to_ptr.hbm [resolvable:$true] %s570
          %576 = dma.vmem_to_hbm [thread:$0]  %s569, 256, %s571, %s556, 128, 128, 8
        $region52: #{tpu_custom_call.1} parent=39 // pred_fallthru
          _
      $region40: #{tpu_custom_call.1} parent=5 // pred_fallthru
        _
      %p577 = scmp.le.s32.totalorder 2, %s16
      // Predicated region
      $region53: #{tpu_custom_call.1} parent=5 // pred_check
        %p578 = pneg %p577
      $region54: #{tpu_custom_call.1} parent=5 // pred_check_branch
        %580 = sbr.rel (%p578) target = $region56
      $region55: #{tpu_custom_call.1} parent=5 // pred_region
        %s581 = ssub.s32 %s16, 2
        // Predicated region
        $region57: #{tpu_custom_call.1} parent=55 // pred_check
          %p582 = pneg %p155
        $region58: #{tpu_custom_call.1} parent=55 // pred_check_branch
          %584 = sbr.rel (%p582) target = $region60
        $region59: #{tpu_custom_call.1} parent=55 // pred_region
          %s585 = sand.u32 %s140, 1
          %s586 = scalar_lea.sflag [#allocation5], %s585
          %s587 = sand.u32 %s140, 1
          %s588 = smul.addr %s587, 16
          %s589 = scalar_lea.vmem [#allocation8], %s588
          %591 = dma.done %s586, 256
        $region60: #{tpu_custom_call.1} parent=55 // pred_fallthru
          _
      $region56: #{tpu_custom_call.1} parent=5 // pred_fallthru
        _
    $region6: #{tpu_custom_call.1} parent=1 // loop_footer
      %s20 = sadd.s32 1, %s16
    $region7: #{tpu_custom_call.1} parent=1 // loop_footer_branch
      %15 = sbr.rel target = $region3
    $region8: #{tpu_custom_call.1} parent=1 // loop_exit
      _
    %592 = vsyncpa [#allocation4], 1
    %s593 = scalar_lea.sflag [#allocation4], 1
    %594 = vsyncpa %s593, 1
    %595 = vsyncpa [#allocation7], 1
    %596 = vsyncpa [#allocation5], 1
    %s597 = scalar_lea.sflag [#allocation5], 1
    %598 = vsyncpa %s597, 1

</llo_original>
